<compile_context>
chip_gen: v7x
topology: tpu7x:2x2x1
jax: 0.10.0
libtpu: 0.0.40
codegen_flags: <defaults>
</compile_context>

<pallas_src>
import functools

import jax
import jax.numpy as jnp
from jax.experimental import pallas as pl
from jax.experimental.pallas import tpu as pltpu


def _local_branch_kernel(x_ref, lh_ref, rh_ref, w_ref, b_ref, o_ref, *,
                         seq_len, tile_rows):
    # x_ref:  (TM, C)    center rows (input dtype)
    # lh_ref: (1, 1, C)  row (start - 1); content only used where pos != 0
    # rh_ref: (1, 1, C)  row (start + TM); content only used where pos != N-1
    # w_ref:  (3, C, TN) fused per-tap weights (compute dtype)
    # b_ref:  (3, TN)    f32: [b_lin@tap0, b_lin@tap1 + b_conv, b_lin@tap2]
    # o_ref:  (TM, TN)
    i = pl.program_id(1)                      # row-tile index (axis 0 is column tiles)
    cdt = w_ref.dtype

    xv = x_ref[...]                           # (TM, C)
    lh = lh_ref[0]                            # (1, C)
    rh = rh_ref[0]                            # (1, C)

    row = jax.lax.broadcasted_iota(jnp.int32, (tile_rows, 1), 0)
    pos = (row + i * tile_rows) % seq_len     # position of each row inside its sequence

    # x_left[n] = x[n-1], x_right[n] = x[n+1]: XLU rotations + one-row halo fix-up.
    x_left = jnp.where(row == 0, lh, pltpu.roll(xv, shift=1, axis=0)).astype(cdt)
    x_right = jnp.where(row == tile_rows - 1, rh,
                        pltpu.roll(xv, shift=tile_rows - 1, axis=0)).astype(cdt)
    xc = xv.astype(cdt)

    b = b_ref[...].astype(jnp.float32)        # (3, TN)
    r1 = jnp.dot(xc, w_ref[1], preferred_element_type=jnp.float32) + b[1:2, :]
    r0 = jnp.dot(x_left, w_ref[0], preferred_element_type=jnp.float32) + b[0:1, :]
    r2 = jnp.dot(x_right, w_ref[2], preferred_element_type=jnp.float32) + b[2:3, :]

    out = (r1
           + jnp.where(pos == 0, 0.0, r0)               # left neighbour is the zero pad
           + jnp.where(pos == seq_len - 1, 0.0, r2))    # right neighbour is the zero pad
    o_ref[...] = out.astype(o_ref.dtype)


def fuse_local_branch_params(w_lin, b_lin, w_conv, b_conv, *,
                             compute_dtype=jnp.bfloat16):
    """Fold Linear + Conv1d(k=3) into per-tap weights (3, C, C) and biases (3, C).

    Call once outside the hot path for inference-style use.
    """
    f32 = jnp.float32
    wlin_t = jnp.transpose(w_lin).astype(f32)                 # (C_in, C_mid)
    taps = jnp.transpose(w_conv, (2, 1, 0)).astype(f32)       # (3, C_mid, C_out)
    w_eff = jnp.einsum('im,jmo->jio', wlin_t, taps)           # (3, C_in, C_out)
    b_lin_f = b_lin.astype(f32)
    bias = jnp.stack([b_lin_f @ taps[0],
                      b_lin_f @ taps[1] + b_conv.astype(f32),
                      b_lin_f @ taps[2]], axis=0)             # (3, C_out), f32
    cdt = jnp.dtype(compute_dtype) if compute_dtype is not None else jnp.result_type(w_lin)
    return w_eff.astype(cdt), bias


def local_branch_conv_fused(x, w_fused, bias_fused, *, tile_rows=1024, col_tile=None):
    """LocalBranch(local_type='conv') forward from pre-fused params.

    x: (B, N, C);  w_fused: (3, C, C);  bias_fused: (3, C) f32.
    """
    B, N, C = x.shape
    assert w_fused.shape == (3, C, C) and bias_fused.shape == (3, C)
    M = B * N
    x_flat = x.reshape(M, C)

    xb = jnp.dtype(x.dtype).itemsize
    cb = jnp.dtype(w_fused.dtype).itemsize

    try:
        phys_vmem = int(pltpu.get_tpu_info().vmem_capacity_bytes)
    except Exception:
        phys_vmem = 64 * 1024 * 1024          # v7x-conservative fallback

    # ---- column tiling: bound the resident (3, C, TN) weight slab (v7x: 64 MiB VMEM) ----
    if col_tile is None:
        if 3 * C * C * cb <= 8 * 1024 * 1024 or C % 128 != 0:
            col_tile = C
        else:
            col_tile = next(t for t in (512, 256, 128) if C % t == 0)
    TN = C if (col_tile >= C or col_tile % 128 != 0) else col_tile
    n_col = pl.cdiv(C, TN)

    # ---- row tiling: >= 2 steps when possible (megacore), sized to the VMEM budget ----
    if M <= 32:
        TM = M                                 # full-extent block (always legal)
    else:
        half = 16 * pl.cdiv(pl.cdiv(M, 2), 16)
        TM = max(16, min(16 * max(1, tile_rows // 16), half))

    def vmem_need(tm):
        return int(1.25 * (
            2 * tm * C * xb          # x row blocks (double buffered)
            + 2 * tm * TN * xb       # output blocks
            + 2 * 3 * C * TN * cb    # weight blocks
            + 2 * tm * C * xb        # rolled copies
            + 3 * tm * C * cb        # compute-dtype operands
            + 3 * tm * TN * 4        # f32 partial sums
        )) + (2 << 20)

    while TM > 64 and vmem_need(TM) > 0.7 * phys_vmem:
        TM = max(64, 16 * ((TM // 2) // 16))
    n_row = pl.cdiv(M, TM)

    vmem_limit = min(max(vmem_need(TM), 32 << 20), int(0.9 * phys_vmem))
    vmem_limit = int(max(vmem_limit, vmem_need(TM)))   # never starve the kernel

    # ---- one halo row per row tile (tiny gather; unused entries are masked in-kernel) ----
    starts = jnp.arange(n_row, dtype=jnp.int32) * TM
    left_halo = jnp.take(x_flat, jnp.maximum(starts - 1, 0), axis=0).reshape(n_row, 1, C)
    right_halo = jnp.take(x_flat, jnp.minimum(starts + TM, M - 1), axis=0).reshape(n_row, 1, C)

    cost = pl.CostEstimate(
        flops=2 * 3 * M * C * C,
        transcendentals=0,
        bytes_accessed=(M * C * xb                      # x
                        + n_col * 3 * C * C * cb        # weights (re-read per column tile)
                        + 2 * n_row * C * xb            # halo rows
                        + 3 * C * 4                     # bias
                        + M * C * xb),                  # out
    )

    kernel = functools.partial(_local_branch_kernel, seq_len=N, tile_rows=TM)

    out_flat = pl.pallas_call(
        kernel,
        out_shape=jax.ShapeDtypeStruct((M, C), x.dtype),
        grid_spec=pltpu.PrefetchScalarGridSpec(
            num_scalar_prefetch=0,
            grid=(n_col, n_row),                 # column axis outer -> weight slab stays put
            in_specs=[
                pl.BlockSpec((TM, C), lambda j, i: (i, 0)),
                pl.BlockSpec((1, 1, C), lambda j, i: (i, 0, 0)),
                pl.BlockSpec((1, 1, C), lambda j, i: (i, 0, 0)),
                pl.BlockSpec((3, C, TN), lambda j, i: (0, 0, j)),
                pl.BlockSpec((3, TN), lambda j, i: (0, j)),
            ],
            out_specs=pl.BlockSpec((TM, TN), lambda j, i: (i, j)),
        ),
        compiler_params=pltpu.CompilerParams(
            dimension_semantics=("parallel", "parallel"),
            vmem_limit_bytes=vmem_limit,
        ),
        cost_estimate=cost,
    )(x_flat, left_halo, right_halo, w_fused, bias_fused)

    return out_flat.reshape(B, N, C)


def local_branch_conv(x, w_lin, b_lin, w_conv, b_conv, *,
                      compute_dtype=jnp.bfloat16, tile_rows=1024, col_tile=None):
    """Convenience wrapper: fuse params (ideally done once) + run the fused kernel."""
    w_fused, bias_fused = fuse_local_branch_params(
        w_lin, b_lin, w_conv, b_conv, compute_dtype=compute_dtype)
    return local_branch_conv_fused(x, w_fused, bias_fused,
                                   tile_rows=tile_rows, col_tile=col_tile)


def _reference(x, w_lin, b_lin, w_conv, b_conv):
    """Pure-JAX reference mirroring the PyTorch forward."""
    y = x @ w_lin.T + b_lin                                  # Linear
    y_pad = jnp.pad(y, ((0, 0), (1, 1), (0, 0)))             # zero pad seq dim
    taps = jnp.transpose(w_conv, (2, 1, 0))                  # (3, C_in, C_out)
    return (y_pad[:, 0:-2] @ taps[0]
            + y_pad[:, 1:-1] @ taps[1]
            + y_pad[:, 2:] @ taps[2]
            + b_conv)


if __name__ == "__main__":
    def make_params(key, C):
        k1, k2, k3, k4 = jax.random.split(key, 4)
        w_lin = jax.random.normal(k1, (C, C), jnp.float32) * 0.05
        b_lin = jax.random.normal(k2, (C,), jnp.float32) * 0.05
        w_conv = jax.random.normal(k3, (C, C, 3), jnp.float32) * 0.05
        b_conv = jax.random.normal(k4, (C,), jnp.float32) * 0.05
        return w_lin, b_lin, w_conv, b_conv

    key = jax.random.PRNGKey(0)

    # (B, N, C, tile_rows, col_tile, compute_dtype, atol, rtol)
    cases = [
        (2, 8, 32, 1024, None, jnp.float32, 1e-3, 1e-3),   # single-tile, f32 exactness
        (2, 8, 32, 1024, None, jnp.bfloat16, 2e-2, 2e-2),  # default bf16 path, C < 128
        (2, 24, 128, 16, None, jnp.bfloat16, 2e-2, 2e-2),  # multi row-tile + in-tile seq edges
        (2, 20, 64, 16, None, jnp.bfloat16, 2e-2, 2e-2),   # partial last row tile
        (2, 24, 256, 16, 128, jnp.bfloat16, 2e-2, 2e-2),   # column-tiled weights
    ]

    for idx, (B, N, C, tr, ct, cdt, atol, rtol) in enumerate(cases):
        key, kx, kp = jax.random.split(key, 3)
        x = jax.random.normal(kx, (B, N, C), jnp.float32)
        w_lin, b_lin, w_conv, b_conv = make_params(kp, C)

        ref = _reference(x, w_lin, b_lin, w_conv, b_conv)
        out = jax.block_until_ready(
            local_branch_conv(x, w_lin, b_lin, w_conv, b_conv,
                              compute_dtype=cdt, tile_rows=tr, col_tile=ct))

        assert out.shape == (B, N, C), f"case {idx}: bad shape {out.shape}"
        err = float(jnp.max(jnp.abs(out.astype(jnp.float32) - ref)))
        bound = float(atol + rtol * jnp.max(jnp.abs(ref)))
        assert err < bound, f"case {idx}: max abs err {err} exceeds {bound}"

    print("KERNEL_OK")
</pallas_src>

<mosaic_0001>
module attributes {stable_mosaic.version = 11 : i64} {
  func.func @_local_branch_kernel(%arg0: i32, %arg1: i32, %arg2: memref<16x32xf32, #tpu.memory_space<vmem>>, %arg3: memref<1x1x32xf32, #tpu.memory_space<vmem>>, %arg4: memref<1x1x32xf32, #tpu.memory_space<vmem>>, %arg5: memref<3x32x32xf32, #tpu.memory_space<vmem>>, %arg6: memref<3x32xf32, #tpu.memory_space<vmem>>, %arg7: memref<16x32xf32, #tpu.memory_space<vmem>>) attributes {dimension_semantics = [#tpu.dimension_semantics<parallel>, #tpu.dimension_semantics<parallel>], iteration_bounds = array<i64: 1, 1>, scalar_prefetch = 0 : i64, scratch_operands = 0 : i64, tpu.core_type = #tpu.core_type<tc>, window_params = [{transform_indices = @transform_0, window_bounds = array<i64: 16, 32>}, {transform_indices = @transform_1, window_bounds = array<i64: 1, 1, 32>}, {transform_indices = @transform_2, window_bounds = array<i64: 1, 1, 32>}, {transform_indices = @transform_3, window_bounds = array<i64: 3, 32, 32>}, {transform_indices = @transform_4, window_bounds = array<i64: 3, 32>}, {transform_indices = @transform_5, window_bounds = array<i64: 16, 32>}]} {
    %c0 = arith.constant 0 : index
    %c0_0 = arith.constant 0 : index
    %0 = vector.load %arg2[%c0, %c0_0] : memref<16x32xf32, #tpu.memory_space<vmem>>, vector<16x32xf32>
    %c0_1 = arith.constant 0 : index
    %c0_2 = arith.constant 0 : index
    %c0_3 = arith.constant 0 : index
    %1 = vector.load %arg3[%c0_1, %c0_2, %c0_3] : memref<1x1x32xf32, #tpu.memory_space<vmem>>, vector<1x1x32xf32>
    %2 = vector.shape_cast %1 : vector<1x1x32xf32> to vector<1x32xf32>
    %c0_4 = arith.constant 0 : index
    %c0_5 = arith.constant 0 : index
    %c0_6 = arith.constant 0 : index
    %3 = vector.load %arg4[%c0_4, %c0_5, %c0_6] : memref<1x1x32xf32, #tpu.memory_space<vmem>>, vector<1x1x32xf32>
    %4 = vector.shape_cast %3 : vector<1x1x32xf32> to vector<1x32xf32>
    %5 = tpu.iota {dimensions = array<i32: 0>} : vector<16x1xi32>
    %c16_i32 = arith.constant 16 : i32
    %6 = arith.muli %arg1, %c16_i32 : i32
    %7 = vector.broadcast %6 : i32 to vector<16x1xi32>
    %8 = arith.addi %5, %7 : vector<16x1xi32>
    %c8_i32 = arith.constant 8 : i32
    %c0_i32 = arith.constant 0 : i32
    %9 = arith.cmpi eq, %c8_i32, %c0_i32 : i32
    %c1_i32 = arith.constant 1 : i32
    %10 = arith.select %9, %c1_i32, %c8_i32 : i32
    %11 = vector.broadcast %10 : i32 to vector<16x1xi32>
    %12 = arith.remsi %8, %11 : vector<16x1xi32>
    %c0_i32_7 = arith.constant 0 : i32
    %13 = vector.broadcast %c0_i32_7 : i32 to vector<16x1xi32>
    %14 = arith.cmpi ne, %12, %13 : vector<16x1xi32>
    %c0_i32_8 = arith.constant 0 : i32
    %15 = vector.broadcast %c0_i32_8 : i32 to vector<16x1xi32>
    %16 = arith.cmpi slt, %12, %15 : vector<16x1xi32>
    %c0_i32_9 = arith.constant 0 : i32
    %17 = arith.cmpi slt, %10, %c0_i32_9 : i32
    %18 = vector.broadcast %17 : i1 to vector<16x1xi1>
    %19 = vector.broadcast %18 : vector<16x1xi1> to vector<16x1xi1>
    %20 = arith.xori %16, %19 : vector<16x1xi1>
    %21 = arith.andi %20, %14 : vector<16x1xi1>
    %22 = vector.broadcast %10 : i32 to vector<16x1xi32>
    %23 = arith.addi %12, %22 : vector<16x1xi32>
    %24 = arith.select %21, %23, %12 : vector<16x1xi1>, vector<16x1xi32>
    %c0_i32_10 = arith.constant 0 : i32
    %25 = vector.broadcast %c0_i32_10 : i32 to vector<16x1xi32>
    %26 = arith.cmpi eq, %5, %25 : vector<16x1xi32>
    %c1_i32_11 = arith.constant 1 : i32
    %27 = tpu.dynamic_rotate %0 by %c1_i32_11 dim 0 : vector<16x32xf32>, i32 -> vector<16x32xf32>
    %28 = vector.shape_cast %26 : vector<16x1xi1> to vector<16x1xi1>
    %29 = vector.broadcast %28 : vector<16x1xi1> to vector<16x32xi1>
    %30 = vector.shape_cast %2 : vector<1x32xf32> to vector<1x32xf32>
    %31 = vector.broadcast %30 : vector<1x32xf32> to vector<16x32xf32>
    %32 = arith.select %29, %31, %27 : vector<16x32xi1>, vector<16x32xf32>
    %c15_i32 = arith.constant 15 : i32
    %33 = vector.broadcast %c15_i32 : i32 to vector<16x1xi32>
    %34 = arith.cmpi eq, %5, %33 : vector<16x1xi32>
    %c15_i32_12 = arith.constant 15 : i32
    %35 = tpu.dynamic_rotate %0 by %c15_i32_12 dim 0 : vector<16x32xf32>, i32 -> vector<16x32xf32>
    %36 = vector.shape_cast %34 : vector<16x1xi1> to vector<16x1xi1>
    %37 = vector.broadcast %36 : vector<16x1xi1> to vector<16x32xi1>
    %38 = vector.shape_cast %4 : vector<1x32xf32> to vector<1x32xf32>
    %39 = vector.broadcast %38 : vector<1x32xf32> to vector<16x32xf32>
    %40 = arith.select %37, %39, %35 : vector<16x32xi1>, vector<16x32xf32>
    %c0_13 = arith.constant 0 : index
    %c0_14 = arith.constant 0 : index
    %41 = vector.load %arg6[%c0_13, %c0_14] : memref<3x32xf32, #tpu.memory_space<vmem>>, vector<3x32xf32>
    %c1 = arith.constant 1 : index
    %c0_15 = arith.constant 0 : index
    %c0_16 = arith.constant 0 : index
    %42 = vector.load %arg5[%c1, %c0_15, %c0_16] : memref<3x32x32xf32, #tpu.memory_space<vmem>>, vector<1x32x32xf32>
    %43 = vector.shape_cast %42 : vector<1x32x32xf32> to vector<32x32xf32>
    %cst = arith.constant dense<0.000000e+00> : vector<16x32xf32>
    %44 = tpu.matmul %0, %43, %cst {dimension_numbers = #tpu.dot_dimension_numbers<[1], [0], [0], [1], [0, 0, 1, 1], [], []>} : vector<16x32xf32>, vector<32x32xf32>, vector<16x32xf32> -> vector<16x32xf32>
    %45 = vector.extract_strided_slice %41 {offsets = [1, 0], sizes = [1, 32], strides = [1, 1]} : vector<3x32xf32> to vector<1x32xf32>
    %46 = vector.broadcast %45 : vector<1x32xf32> to vector<16x32xf32>
    %47 = arith.addf %44, %46 : vector<16x32xf32>
    %c0_17 = arith.constant 0 : index
    %c0_18 = arith.constant 0 : index
    %c0_19 = arith.constant 0 : index
    %48 = vector.load %arg5[%c0_17, %c0_18, %c0_19] : memref<3x32x32xf32, #tpu.memory_space<vmem>>, vector<1x32x32xf32>
    %49 = vector.shape_cast %48 : vector<1x32x32xf32> to vector<32x32xf32>
    %cst_20 = arith.constant dense<0.000000e+00> : vector<16x32xf32>
    %50 = tpu.matmul %32, %49, %cst_20 {dimension_numbers = #tpu.dot_dimension_numbers<[1], [0], [0], [1], [0, 0, 1, 1], [], []>} : vector<16x32xf32>, vector<32x32xf32>, vector<16x32xf32> -> vector<16x32xf32>
    %51 = vector.extract_strided_slice %41 {offsets = [0, 0], sizes = [1, 32], strides = [1, 1]} : vector<3x32xf32> to vector<1x32xf32>
    %52 = vector.broadcast %51 : vector<1x32xf32> to vector<16x32xf32>
    %53 = arith.addf %50, %52 : vector<16x32xf32>
    %c2 = arith.constant 2 : index
    %c0_21 = arith.constant 0 : index
    %c0_22 = arith.constant 0 : index
    %54 = vector.load %arg5[%c2, %c0_21, %c0_22] : memref<3x32x32xf32, #tpu.memory_space<vmem>>, vector<1x32x32xf32>
    %55 = vector.shape_cast %54 : vector<1x32x32xf32> to vector<32x32xf32>
    %cst_23 = arith.constant dense<0.000000e+00> : vector<16x32xf32>
    %56 = tpu.matmul %40, %55, %cst_23 {dimension_numbers = #tpu.dot_dimension_numbers<[1], [0], [0], [1], [0, 0, 1, 1], [], []>} : vector<16x32xf32>, vector<32x32xf32>, vector<16x32xf32> -> vector<16x32xf32>
    %57 = vector.extract_strided_slice %41 {offsets = [2, 0], sizes = [1, 32], strides = [1, 1]} : vector<3x32xf32> to vector<1x32xf32>
    %58 = vector.broadcast %57 : vector<1x32xf32> to vector<16x32xf32>
    %59 = arith.addf %56, %58 : vector<16x32xf32>
    %c0_i32_24 = arith.constant 0 : i32
    %60 = vector.broadcast %c0_i32_24 : i32 to vector<16x1xi32>
    %61 = arith.cmpi eq, %24, %60 : vector<16x1xi32>
    %cst_25 = arith.constant 0.000000e+00 : f32
    %62 = vector.shape_cast %61 : vector<16x1xi1> to vector<16x1xi1>
    %63 = vector.broadcast %62 : vector<16x1xi1> to vector<16x32xi1>
    %64 = vector.broadcast %cst_25 : f32 to vector<16x32xf32>
    %65 = arith.select %63, %64, %53 : vector<16x32xi1>, vector<16x32xf32>
    %66 = arith.addf %47, %65 : vector<16x32xf32>
    %c7_i32 = arith.constant 7 : i32
    %67 = vector.broadcast %c7_i32 : i32 to vector<16x1xi32>
    %68 = arith.cmpi eq, %24, %67 : vector<16x1xi32>
    %cst_26 = arith.constant 0.000000e+00 : f32
    %69 = vector.shape_cast %68 : vector<16x1xi1> to vector<16x1xi1>
    %70 = vector.broadcast %69 : vector<16x1xi1> to vector<16x32xi1>
    %71 = vector.broadcast %cst_26 : f32 to vector<16x32xf32>
    %72 = arith.select %70, %71, %59 : vector<16x32xi1>, vector<16x32xf32>
    %73 = arith.addf %66, %72 : vector<16x32xf32>
    %c0_27 = arith.constant 0 : index
    %c0_28 = arith.constant 0 : index
    %74 = vector.load %arg7[%c0_27, %c0_28] : memref<16x32xf32, #tpu.memory_space<vmem>>, vector<16x32xf32>
    tpu.vector_store %arg7[%c0_27, %c0_28], %73 {strides = array<i32>} : memref<16x32xf32, #tpu.memory_space<vmem>>, vector<16x32xf32>,
    return
  }
  func.func @transform_0(%arg0: i32, %arg1: i32) -> (i32, i32) {
    %c0_i32 = arith.constant 0 : i32
    %c0_i32_0 = arith.constant 0 : i32
    return %arg1, %c0_i32 : i32, i32
  }
  func.func @transform_1(%arg0: i32, %arg1: i32) -> (i32, i32, i32) {
    %c0_i32 = arith.constant 0 : i32
    %c0_i32_0 = arith.constant 0 : i32
    %c0_i32_1 = arith.constant 0 : i32
    return %arg1, %c0_i32, %c0_i32_0 : i32, i32, i32
  }
  func.func @transform_2(%arg0: i32, %arg1: i32) -> (i32, i32, i32) {
    %c0_i32 = arith.constant 0 : i32
    %c0_i32_0 = arith.constant 0 : i32
    %c0_i32_1 = arith.constant 0 : i32
    return %arg1, %c0_i32, %c0_i32_0 : i32, i32, i32
  }
  func.func @transform_3(%arg0: i32, %arg1: i32) -> (i32, i32, i32) {
    %c0_i32 = arith.constant 0 : i32
    %c0_i32_0 = arith.constant 0 : i32
    %c0_i32_1 = arith.constant 0 : i32
    return %c0_i32, %c0_i32_0, %arg0 : i32, i32, i32
  }
  func.func @transform_4(%arg0: i32, %arg1: i32) -> (i32, i32) {
    %c0_i32 = arith.constant 0 : i32
    %c0_i32_0 = arith.constant 0 : i32
    return %c0_i32, %arg0 : i32, i32
  }
  func.func @transform_5(%arg0: i32, %arg1: i32) -> (i32, i32) {
    %c0_i32 = arith.constant 0 : i32
    return %arg1, %arg0 : i32, i32
  }
}

</mosaic_0001>

<llo_original>
// kernel: tpu_custom_call.1
$region0: #{tpu_custom_call.1}
  #allocation0 [shape = 'u32[]', space=smem, size = 0x4, offset = 0x4, fixed_abs, tag = 'smem constant byte address 0x4 - core index']
  #allocation1 [shape = 'u32[144,128]{1,0:T(1,128)}', space=vmem, size = 0x12000, scoped, tag = 'internal scratch']
  %s0 = inlined_call_operand.hbm [shape: f32[16,32], index: 0, kind: input, shape index: {}]
  %s1 = inlined_call_operand.vmem [shape: f32[1,1,32], index: 1, kind: input, shape index: {}]
  %s2 = inlined_call_operand.vmem [shape: f32[1,1,32], index: 2, kind: input, shape index: {}]
  %s3 = inlined_call_operand.hbm [shape: f32[3,32,32], index: 3, kind: input, shape index: {}]
  %s4 = inlined_call_operand.vmem [shape: f32[3,32], index: 4, kind: input, shape index: {}]
  %s5 = inlined_call_operand.hbm [shape: f32[16,32], index: 5, kind: output, shape index: {}]
  %s6 = sld [smem:[#allocation0]]
  $region38: #{tpu_custom_call.1} parent=0
    _
  %s8 = ssub.s32 1, %s6
  %s9 = scalar_select 0, %s8, %s6
  $region1: #{tpu_custom_call.1} parent=0
    #allocation2 [shape = 'u8[8192]{0}', space=vmem, size = 0x2000, scoped, tag = 'input window, operand 0, single buffered']
    #allocation3 [shape = 's32[1]{0}', space=sflag, size = 0x4, scoped, tag = 'scoped memory for tpu_custom_call.1']
    #allocation4 [shape = 's32[1]{0}', space=sflag, size = 0x4, scoped, tag = 'scoped memory for tpu_custom_call.1']
    #allocation5 [shape = 'u8[49152]{0}', space=vmem, size = 0xc000, scoped, tag = 'input window, operand 3, single buffered']
    #allocation6 [shape = 's32[1]{0}', space=sflag, size = 0x4, scoped, tag = 'scoped memory for tpu_custom_call.1']
    #allocation7 [shape = 'u8[8192]{0}', space=vmem, size = 0x2000, scoped, tag = 'output window, operand 0, single buffered']
    %10 = vsyncpa [#allocation3], 0
    %11 = vsyncpa [#allocation6], 0
    %12 = vsyncpa [#allocation4], 0
    // Predicated region
    $region2: #{tpu_custom_call.1} parent=1 // pred_check
      _
    $region3: #{tpu_custom_call.1} parent=1 // pred_check_branch
      %14 = sbr.rel (0) target = $region5
    $region4: #{tpu_custom_call.1} parent=1 // pred_region
      %s16 = ssub.s32 256, 256
      %17 = vsyncadd [#allocation3], %s16
      %s18 = sshll.u32 [#allocation2], 4
      %s19 = int_to_ptr.vmem [resolvable:$true] %s18
      %24 = dma.hbm_to_vmem [thread:$0]  %s0, 256, %s19, [#allocation3], 128, 128, 8
    $region5: #{tpu_custom_call.1} parent=1 // pred_fallthru
      _
    // Predicated region
    $region6: #{tpu_custom_call.1} parent=1 // pred_check
      _
    $region7: #{tpu_custom_call.1} parent=1 // pred_check_branch
      %26 = sbr.rel (0) target = $region9
    $region8: #{tpu_custom_call.1} parent=1 // pred_region
      _
    $region9: #{tpu_custom_call.1} parent=1 // pred_fallthru
      _
    // Predicated region
    $region10: #{tpu_custom_call.1} parent=1 // pred_check
      _
    $region11: #{tpu_custom_call.1} parent=1 // pred_check_branch
      %28 = sbr.rel (0) target = $region13
    $region12: #{tpu_custom_call.1} parent=1 // pred_region
      _
    $region13: #{tpu_custom_call.1} parent=1 // pred_fallthru
      _
    // Predicated region
    $region14: #{tpu_custom_call.1} parent=1 // pred_check
      _
    $region15: #{tpu_custom_call.1} parent=1 // pred_check_branch
      %30 = sbr.rel (0) target = $region17
    $region16: #{tpu_custom_call.1} parent=1 // pred_region
      %s32 = ssub.s32 1536, 1536
      %33 = vsyncadd [#allocation6], %s32
      %s34 = sshll.u32 [#allocation5], 4
      %s35 = int_to_ptr.vmem [resolvable:$true] %s34
      %40 = dma.hbm_to_vmem [thread:$0]  %s3, 1536, %s35, [#allocation6], 128, 128, 8
    $region17: #{tpu_custom_call.1} parent=1 // pred_fallthru
      _
    // Predicated region
    $region18: #{tpu_custom_call.1} parent=1 // pred_check
      _
    $region19: #{tpu_custom_call.1} parent=1 // pred_check_branch
      %42 = sbr.rel (0) target = $region21
    $region20: #{tpu_custom_call.1} parent=1 // pred_region
      _
    $region21: #{tpu_custom_call.1} parent=1 // pred_fallthru
      _
    // Predicated region
    $region22: #{tpu_custom_call.1} parent=1 // pred_check
      _
    $region23: #{tpu_custom_call.1} parent=1 // pred_check_branch
      %44 = sbr.rel (0) target = $region25
    $region24: #{tpu_custom_call.1} parent=1 // pred_region
      %45 = dma.done [#allocation3], 256
    $region25: #{tpu_custom_call.1} parent=1 // pred_fallthru
      _
    // Predicated region
    $region26: #{tpu_custom_call.1} parent=1 // pred_check
      _
    $region27: #{tpu_custom_call.1} parent=1 // pred_check_branch
      %47 = sbr.rel (0) target = $region29
    $region28: #{tpu_custom_call.1} parent=1 // pred_region
      %48 = dma.done [#allocation6], 1536
    $region29: #{tpu_custom_call.1} parent=1 // pred_fallthru
      _
    %v49 = vld [vmem:[#allocation2] sm:$0xff]
    %v50 = vld [vmem:[#allocation2 + $0x8] sm:$0xff]
    %v51 = vld [vmem:[%s1] sm:$0x1]
    %v52 = vld [vmem:[%s2] sm:$0x1]
    %v53 = vlaneseq
    %v54 = vshrl.u32 %v53, 7
    %v55 = vadd.s32 %v54, 8
    %s56 = smul.u32 0, 16
    %v57 = vstv %s56
    %v58 = vadd.s32 %v54, %v57
    %v59 = vadd.s32 %v55, %v57
    %vm60 = vcmp.lt.s32.totalorder %v58, 0
    %v61 = vsub.s32 0, %v58
    %v62 = vsel %vm60, %v61, %v58
    %v63 = vshrl.u32 %v62, 3
    %v64 = vand.u32 %v62, 7
    %v65 = vsub.s32 0, %v64
    %v66 = vsel %vm60, %v65, %v64
    %vm67 = vcmp.lt.s32.totalorder %v59, 0
    %v68 = vsub.s32 0, %v59
    %v69 = vsel %vm67, %v68, %v59
    %v70 = vshrl.u32 %v69, 3
    %v71 = vand.u32 %v69, 7
    %v72 = vsub.s32 0, %v71
    %v73 = vsel %vm67, %v72, %v71
    %vm74 = vcmp.ne.s32.totalorder %v66, 0
    %vm75 = vcmp.ne.s32.totalorder %v73, 0
    %vm76 = vcmp.lt.s32.totalorder %v66, 0
    %vm77 = vcmp.lt.s32.totalorder %v73, 0
    %vm78 = vmand %vm76, %vm74
    %vm79 = vmand %vm77, %vm75
    %v80 = vadd.s32 %v66, 8
    %v81 = vadd.s32 %v73, 8
    %v82 = vsel %vm78, %v80, %v66
    %v83 = vsel %vm79, %v81, %v73
    %vm84 = vcmp.eq.s32.totalorder %v54, 0
    %vm85 = vcmp.eq.s32.totalorder %v55, 0
    %v86 = vrot.slane %v49, 7
    %v87 = vrot.slane %v50, 7
    %vm88 = vcmp.lt.s32.totalorder %v54, 1
    %v89 = vsel %vm88, %v86, %v87
    %v90 = vsel %vm88, %v87, %v86
    %v91 = vsel %vm84, 1, 0
    %v92 = vsel %vm85, 1, 0
    %vm93 = vcmp.eq.s32.totalorder %v91, 1
    %vm94 = vcmp.eq.s32.totalorder %v92, 1
    %v96 = vlaneseq
    %v97 = vshrl.u32 %v96, 7
    %v98 = vsub.s32 0, %v97
    %v99 = vrot.slane %v51, %v98
    %v101 = vsel %vm93, %v99, %v90
    %v102 = vsel %vm94, %v99, %v89
    %vm103 = vcmp.eq.s32.totalorder %v54, 15
    %vm104 = vcmp.eq.s32.totalorder %v55, 15
    %v105 = vrot.slane %v49, 1
    %v106 = vrot.slane %v50, 1
    %vm107 = vcmp.lt.s32.totalorder %v54, 7
    %v108 = vsel %vm107, %v105, %v106
    %v109 = vsel %vm107, %v106, %v105
    %v110 = vsel %vm103, 1, 0
    %v111 = vsel %vm104, 1, 0
    %vm112 = vcmp.eq.s32.totalorder %v110, 1
    %vm113 = vcmp.eq.s32.totalorder %v111, 1
    %v115 = vlaneseq
    %v116 = vshrl.u32 %v115, 7
    %v117 = vsub.s32 0, %v116
    %v118 = vrot.slane %v52, %v117
    %v120 = vsel %vm112, %v118, %v108
    %v121 = vsel %vm113, %v118, %v109
    %v122 = vld [vmem:[%s4] sm:$0x7]
    %s123 = scalar_lea.vmem [#allocation5], 32
    %v124 = vld [vmem:[%s123] sm:$0xff]
    %v125 = vld [vmem:[%s123 + $0x8] sm:$0xff]
    %v126 = vld [vmem:[%s123 + $0x10] sm:$0xff]
    %v127 = vld [vmem:[%s123 + $0x18] sm:$0xff]
    %v128 = vlaneseq
    %v129 = vshrl.u32 %v128, 7
    %v130 = vsub.s32 1, %v129
    %v131 = vrot.slane %v122, %v130
    %vm132 = vcmask 261120
    %v134 = vsel %vm132, %v49, 0
    %v137 = vsel %vm132, %v50, 0
    %139 = vmatprep.subr.mxu0 0.0
    %140 = vmatpush1.msra.mxu0 %v124
    %141 = vmatprep.subr.mxu0 0.0
    %142 = vmatpush1.msra.mxu0 %v125
    %143 = vmatprep.subr.mxu0 0.0
    %144 = vmatpush1.msra.mxu0 %v126
    %145 = vmatprep.subr.mxu0 0.0
    %146 = vmatpush1.msra.mxu0 %v127
    %147 = vmatprep.subr.mxu0 0.0
    %148 = vmatpush1.msra.mxu0 0.0
    %149 = vmatprep.subr.mxu0 0.0
    %150 = vmatpush1.msra.mxu0 0.0
    %151 = vmatprep.subr.mxu0 0.0
    %152 = vmatpush1.msra.mxu0 0.0
    %153 = vmatprep.subr.mxu0 0.0
    %154 = vmatpush1.msra.mxu0 0.0
    %155 = vmatprep.subr.mxu0 0.0
    %156 = vmatpush1.msra.mxu0 0.0
    %157 = vmatprep.subr.mxu0 0.0
    %158 = vmatpush1.msra.mxu0 0.0
    %159 = vmatprep.subr.mxu0 0.0
    %160 = vmatpush1.msra.mxu0 0.0
    %161 = vmatprep.subr.mxu0 0.0
    %162 = vmatpush1.msra.mxu0 0.0
    %163 = vmatprep.subr.mxu0 0.0
    %164 = vmatpush1.msra.mxu0 0.0
    %165 = vmatprep.subr.mxu0 0.0
    %166 = vmatpush1.msra.mxu0 0.0
    %167 = vmatprep.subr.mxu0 0.0
    %168 = vmatpush1.msra.mxu0 0.0
    %169 = vmatprep.subr.mxu0 0.0
    %170 = vmatpush1.msra.mxu0 0.0
    %171 = vmatprep.subr.mxu0 0.0
    %172 = vmatpush1.msra.mxu0 0.0
    %173 = vmatprep.subr.mxu0 0.0
    %174 = vmatpush1.msra.mxu0 0.0
    %175 = vmatprep.subr.mxu0 0.0
    %176 = vmatpush1.msra.mxu0 0.0
    %177 = vmatprep.subr.mxu0 0.0
    %178 = vmatpush1.msra.mxu0 0.0
    %179 = vmatprep.subr.mxu0 0.0
    %180 = vmatpush1.msra.mxu0 0.0
    %181 = vmatprep.subr.mxu0 0.0
    %182 = vmatpush1.msra.mxu0 0.0
    %183 = vmatprep.subr.mxu0 0.0
    %184 = vmatpush1.msra.mxu0 0.0
    %185 = vmatprep.subr.mxu0 0.0
    %186 = vmatpush1.msra.mxu0 0.0
    %187 = vmatprep.subr.mxu0 0.0
    %188 = vmatpush1.msra.mxu0 0.0
    %189 = vmatprep.subr.mxu0 0.0
    %190 = vmatpush1.msra.mxu0 0.0
    %191 = vmatprep.subr.mxu0 0.0
    %192 = vmatpush1.msra.mxu0 0.0
    %193 = vmatprep.subr.mxu0 0.0
    %194 = vmatpush1.msra.mxu0 0.0
    %195 = vmatprep.subr.mxu0 0.0
    %196 = vmatpush1.msra.mxu0 0.0
    %197 = vmatprep.subr.mxu0 0.0
    %198 = vmatpush1.msra.mxu0 0.0
    %199 = vmatprep.subr.mxu0 0.0
    %200 = vmatpush1.msra.mxu0 0.0
    %201 = vmatprep.subr.mxu0 0.0
    %202 = vmatpush1.msra.mxu0 0.0
    %203 = vmatprep.mubr.f32.mxu0 0.0
    %204 = vmatmul.mubr.f32.gmra.mrb[0].mxu0 %v134
    %v205 = vpop.f32.mrb[0].mxu0
    %v206 = vadd.f32 %v131, %v205
    %v207 = vpop.f32.mrb[0].mxu0
    %208 = vmatprep.mubr.f32.mxu0 0.0
    %209 = vmatmul.mubr.f32.gmra.mrb[0].mxu0 %v137
    %v210 = vpop.f32.mrb[0].mxu0
    %v211 = vadd.f32 %v131, %v210
    %v212 = vpop.f32.mrb[0].mxu0
    %213 = vdwg.mxu0
    %v214 = vld [vmem:[#allocation5] sm:$0xff]
    %v215 = vld [vmem:[#allocation5 + $0x8] sm:$0xff]
    %v216 = vld [vmem:[#allocation5 + $0x10] sm:$0xff]
    %v217 = vld [vmem:[#allocation5 + $0x18] sm:$0xff]
    %v218 = vlaneseq
    %v219 = vshrl.u32 %v218, 7
    %v220 = vsub.s32 0, %v219
    %v221 = vrot.slane %v122, %v220
    %v223 = vsel %vm132, %v101, 0
    %v226 = vsel %vm132, %v102, 0
    %228 = vmatprep.subr.mxu0 0.0
    %229 = vmatpush1.msra.mxu0 %v214
    %230 = vmatprep.subr.mxu0 0.0
    %231 = vmatpush1.msra.mxu0 %v215
    %232 = vmatprep.subr.mxu0 0.0
    %233 = vmatpush1.msra.mxu0 %v216
    %234 = vmatprep.subr.mxu0 0.0
    %235 = vmatpush1.msra.mxu0 %v217
    %236 = vmatprep.subr.mxu0 0.0
    %237 = vmatpush1.msra.mxu0 0.0
    %238 = vmatprep.subr.mxu0 0.0
    %239 = vmatpush1.msra.mxu0 0.0
    %240 = vmatprep.subr.mxu0 0.0
    %241 = vmatpush1.msra.mxu0 0.0
    %242 = vmatprep.subr.mxu0 0.0
    %243 = vmatpush1.msra.mxu0 0.0
    %244 = vmatprep.subr.mxu0 0.0
    %245 = vmatpush1.msra.mxu0 0.0
    %246 = vmatprep.subr.mxu0 0.0
    %247 = vmatpush1.msra.mxu0 0.0
    %248 = vmatprep.subr.mxu0 0.0
    %249 = vmatpush1.msra.mxu0 0.0
    %250 = vmatprep.subr.mxu0 0.0
    %251 = vmatpush1.msra.mxu0 0.0
    %252 = vmatprep.subr.mxu0 0.0
    %253 = vmatpush1.msra.mxu0 0.0
    %254 = vmatprep.subr.mxu0 0.0
    %255 = vmatpush1.msra.mxu0 0.0
    %256 = vmatprep.subr.mxu0 0.0
    %257 = vmatpush1.msra.mxu0 0.0
    %258 = vmatprep.subr.mxu0 0.0
    %259 = vmatpush1.msra.mxu0 0.0
    %260 = vmatprep.subr.mxu0 0.0
    %261 = vmatpush1.msra.mxu0 0.0
    %262 = vmatprep.subr.mxu0 0.0
    %263 = vmatpush1.msra.mxu0 0.0
    %264 = vmatprep.subr.mxu0 0.0
    %265 = vmatpush1.msra.mxu0 0.0
    %266 = vmatprep.subr.mxu0 0.0
    %267 = vmatpush1.msra.mxu0 0.0
    %268 = vmatprep.subr.mxu0 0.0
    %269 = vmatpush1.msra.mxu0 0.0
    %270 = vmatprep.subr.mxu0 0.0
    %271 = vmatpush1.msra.mxu0 0.0
    %272 = vmatprep.subr.mxu0 0.0
    %273 = vmatpush1.msra.mxu0 0.0
    %274 = vmatprep.subr.mxu0 0.0
    %275 = vmatpush1.msra.mxu0 0.0
    %276 = vmatprep.subr.mxu0 0.0
    %277 = vmatpush1.msra.mxu0 0.0
    %278 = vmatprep.subr.mxu0 0.0
    %279 = vmatpush1.msra.mxu0 0.0
    %280 = vmatprep.subr.mxu0 0.0
    %281 = vmatpush1.msra.mxu0 0.0
    %282 = vmatprep.subr.mxu0 0.0
    %283 = vmatpush1.msra.mxu0 0.0
    %284 = vmatprep.subr.mxu0 0.0
    %285 = vmatpush1.msra.mxu0 0.0
    %286 = vmatprep.subr.mxu0 0.0
    %287 = vmatpush1.msra.mxu0 0.0
    %288 = vmatprep.subr.mxu0 0.0
    %289 = vmatpush1.msra.mxu0 0.0
    %290 = vmatprep.subr.mxu0 0.0
    %291 = vmatpush1.msra.mxu0 0.0
    %292 = vmatprep.mubr.f32.mxu0 0.0
    %293 = vmatmul.mubr.f32.gmra.mrb[0].mxu0 %v223
    %v294 = vpop.f32.mrb[0].mxu0
    %v295 = vadd.f32 %v221, %v294
    %v296 = vpop.f32.mrb[0].mxu0
    %297 = vmatprep.mubr.f32.mxu0 0.0
    %298 = vmatmul.mubr.f32.gmra.mrb[0].mxu0 %v226
    %v299 = vpop.f32.mrb[0].mxu0
    %v300 = vadd.f32 %v221, %v299
    %v301 = vpop.f32.mrb[0].mxu0
    %302 = vdwg.mxu0
    %s303 = scalar_lea.vmem [#allocation5], 64
    %v304 = vld [vmem:[%s303] sm:$0xff]
    %v305 = vld [vmem:[%s303 + $0x8] sm:$0xff]
    %v306 = vld [vmem:[%s303 + $0x10] sm:$0xff]
    %v307 = vld [vmem:[%s303 + $0x18] sm:$0xff]
    %v308 = vlaneseq
    %v309 = vshrl.u32 %v308, 7
    %v310 = vsub.s32 2, %v309
    %v311 = vrot.slane %v122, %v310
    %v313 = vsel %vm132, %v120, 0
    %v316 = vsel %vm132, %v121, 0
    %318 = vmatprep.subr.mxu0 0.0
    %319 = vmatpush1.msra.mxu0 %v304
    %320 = vmatprep.subr.mxu0 0.0
    %321 = vmatpush1.msra.mxu0 %v305
    %322 = vmatprep.subr.mxu0 0.0
    %323 = vmatpush1.msra.mxu0 %v306
    %324 = vmatprep.subr.mxu0 0.0
    %325 = vmatpush1.msra.mxu0 %v307
    %326 = vmatprep.subr.mxu0 0.0
    %327 = vmatpush1.msra.mxu0 0.0
    %328 = vmatprep.subr.mxu0 0.0
    %329 = vmatpush1.msra.mxu0 0.0
    %330 = vmatprep.subr.mxu0 0.0
    %331 = vmatpush1.msra.mxu0 0.0
    %332 = vmatprep.subr.mxu0 0.0
    %333 = vmatpush1.msra.mxu0 0.0
    %334 = vmatprep.subr.mxu0 0.0
    %335 = vmatpush1.msra.mxu0 0.0
    %336 = vmatprep.subr.mxu0 0.0
    %337 = vmatpush1.msra.mxu0 0.0
    %338 = vmatprep.subr.mxu0 0.0
    %339 = vmatpush1.msra.mxu0 0.0
    %340 = vmatprep.subr.mxu0 0.0
    %341 = vmatpush1.msra.mxu0 0.0
    %342 = vmatprep.subr.mxu0 0.0
    %343 = vmatpush1.msra.mxu0 0.0
    %344 = vmatprep.subr.mxu0 0.0
    %345 = vmatpush1.msra.mxu0 0.0
    %346 = vmatprep.subr.mxu0 0.0
    %347 = vmatpush1.msra.mxu0 0.0
    %348 = vmatprep.subr.mxu0 0.0
    %349 = vmatpush1.msra.mxu0 0.0
    %350 = vmatprep.subr.mxu0 0.0
    %351 = vmatpush1.msra.mxu0 0.0
    %352 = vmatprep.subr.mxu0 0.0
    %353 = vmatpush1.msra.mxu0 0.0
    %354 = vmatprep.subr.mxu0 0.0
    %355 = vmatpush1.msra.mxu0 0.0
    %356 = vmatprep.subr.mxu0 0.0
    %357 = vmatpush1.msra.mxu0 0.0
    %358 = vmatprep.subr.mxu0 0.0
    %359 = vmatpush1.msra.mxu0 0.0
    %360 = vmatprep.subr.mxu0 0.0
    %361 = vmatpush1.msra.mxu0 0.0
    %362 = vmatprep.subr.mxu0 0.0
    %363 = vmatpush1.msra.mxu0 0.0
    %364 = vmatprep.subr.mxu0 0.0
    %365 = vmatpush1.msra.mxu0 0.0
    %366 = vmatprep.subr.mxu0 0.0
    %367 = vmatpush1.msra.mxu0 0.0
    %368 = vmatprep.subr.mxu0 0.0
    %369 = vmatpush1.msra.mxu0 0.0
    %370 = vmatprep.subr.mxu0 0.0
    %371 = vmatpush1.msra.mxu0 0.0
    %372 = vmatprep.subr.mxu0 0.0
    %373 = vmatpush1.msra.mxu0 0.0
    %374 = vmatprep.subr.mxu0 0.0
    %375 = vmatpush1.msra.mxu0 0.0
    %376 = vmatprep.subr.mxu0 0.0
    %377 = vmatpush1.msra.mxu0 0.0
    %378 = vmatprep.subr.mxu0 0.0
    %379 = vmatpush1.msra.mxu0 0.0
    %380 = vmatprep.subr.mxu0 0.0
    %381 = vmatpush1.msra.mxu0 0.0
    %382 = vmatprep.mubr.f32.mxu0 0.0
    %383 = vmatmul.mubr.f32.gmra.mrb[0].mxu0 %v313
    %v384 = vpop.f32.mrb[0].mxu0
    %v385 = vadd.f32 %v311, %v384
    %v386 = vpop.f32.mrb[0].mxu0
    %387 = vmatprep.mubr.f32.mxu0 0.0
    %388 = vmatmul.mubr.f32.gmra.mrb[0].mxu0 %v316
    %v389 = vpop.f32.mrb[0].mxu0
    %v390 = vadd.f32 %v311, %v389
    %v391 = vpop.f32.mrb[0].mxu0
    %392 = vdwg.mxu0
    %vm393 = vcmp.eq.s32.totalorder %v82, 0
    %vm394 = vcmp.eq.s32.totalorder %v83, 0
    %v395 = vsel %vm393, 1, 0
    %v396 = vsel %vm394, 1, 0
    %vm397 = vcmp.eq.s32.totalorder %v395, 1
    %vm398 = vcmp.eq.s32.totalorder %v396, 1
    %v399 = vsel %vm397, 0.0, %v295
    %v400 = vsel %vm398, 0.0, %v300
    %v401 = vadd.f32 %v206, %v399
    %v402 = vadd.f32 %v211, %v400
    %vm403 = vcmp.eq.s32.totalorder %v82, 7
    %vm404 = vcmp.eq.s32.totalorder %v83, 7
    %v405 = vsel %vm403, 1, 0
    %v406 = vsel %vm404, 1, 0
    %vm407 = vcmp.eq.s32.totalorder %v405, 1
    %vm408 = vcmp.eq.s32.totalorder %v406, 1
    %v409 = vsel %vm407, 0.0, %v385
    %v410 = vsel %vm408, 0.0, %v390
    %v411 = vadd.f32 %v401, %v409
    %v412 = vadd.f32 %v402, %v410
    %413 = vst.msk [vmem:[#allocation7] sm:$0xff] %vm132, %v411
    %414 = vst.msk [vmem:[#allocation7 + $0x8] sm:$0xff] %vm132, %v412
    // Predicated region
    $region30: #{tpu_custom_call.1} parent=1 // pred_check
      _
    $region31: #{tpu_custom_call.1} parent=1 // pred_check_branch
      %416 = sbr.rel (0) target = $region33
    $region32: #{tpu_custom_call.1} parent=1 // pred_region
      %s418 = ssub.s32 256, 256
      %419 = vsyncadd [#allocation4], %s418
      %s420 = sshll.u32 [#allocation7], 4
      %s421 = int_to_ptr.vmem [resolvable:$true] %s420
      %426 = dma.vmem_to_hbm [thread:$0]  %s421, 256, %s5, [#allocation4], 128, 128, 8
    $region33: #{tpu_custom_call.1} parent=1 // pred_fallthru
      _
    // Predicated region
    $region34: #{tpu_custom_call.1} parent=1 // pred_check
      _
    $region35: #{tpu_custom_call.1} parent=1 // pred_check_branch
      %428 = sbr.rel (0) target = $region37
    $region36: #{tpu_custom_call.1} parent=1 // pred_region
      %429 = dma.done [#allocation4], 256
    $region37: #{tpu_custom_call.1} parent=1 // pred_fallthru
      _
    %430 = vsyncpa [#allocation3], 1
    %431 = vsyncpa [#allocation6], 1
    %432 = vsyncpa [#allocation4], 1

</llo_original>
